<compile_context>
chip_gen: v5e
topology: v5e:2x2
jax: 0.10.0
libtpu: 0.0.40
codegen_flags: <defaults>
</compile_context>

<pallas_src>
import jax
import jax.numpy as jnp
from jax.experimental import pallas as pl
from jax.experimental.pallas import tpu as pltpu

HIDDEN = 64
LANE = 128


def _round_up(n, m):
    return ((n + m - 1) // m) * m


def _snn_kernel(x_ref, w1_ref, b1_ref, w2_ref, b2_ref, w3_ref, b3_ref, o_ref):
    # x_ref: (TILE_B, IN_PAD) bf16, weights bf16, biases f32 (1, N), out f32.
    x = x_ref[...]

    h1 = jnp.dot(x, w1_ref[...], preferred_element_type=jnp.float32) + b1_ref[...]
    h1 = jnp.maximum(h1, 0.0).astype(jnp.bfloat16)

    h2 = jnp.dot(h1, w2_ref[...], preferred_element_type=jnp.float32) + b2_ref[...]
    h2 = jnp.maximum(h2, 0.0).astype(jnp.bfloat16)

    y = jnp.dot(h2, w3_ref[...], preferred_element_type=jnp.float32) + b3_ref[...]
    o_ref[...] = y.astype(o_ref.dtype)


def _pad2(a, rows, cols):
    return jnp.pad(a, ((0, rows - a.shape[0]), (0, cols - a.shape[1])))


def snn_forward(x, params, *, tile_b=None):
    """x: (B, in_dim) float32. params: logical (unpadded) f32 params."""
    w1, b1, w2, b2, w3, b3 = params
    B, in_dim = x.shape
    out_dim = w3.shape[1]

    in_pad = _round_up(in_dim, LANE)
    hid_pad = _round_up(HIDDEN, LANE)
    out_pad = _round_up(out_dim, LANE)

    if tile_b is None:
        tile_b = min(512, _round_up(B, 8))
    tile_b = max(8, _round_up(tile_b, 8))
    b_pad = _round_up(max(B, tile_b), tile_b)

    # Pad + cast once on the XLA side (zero padding is inert through ReLU/matmul).
    xp = _pad2(x, b_pad, in_pad).astype(jnp.bfloat16)
    w1p = _pad2(w1, in_pad, hid_pad).astype(jnp.bfloat16)
    w2p = _pad2(w2, hid_pad, hid_pad).astype(jnp.bfloat16)
    w3p = _pad2(w3, hid_pad, out_pad).astype(jnp.bfloat16)
    b1p = _pad2(b1, 1, hid_pad).astype(jnp.float32)
    b2p = _pad2(b2, 1, hid_pad).astype(jnp.float32)
    b3p = _pad2(b3, 1, out_pad).astype(jnp.float32)

    grid = (b_pad // tile_b,)

    # Weights/biases: constant block index -> DMA'd once, VMEM-resident across
    # the whole batch grid.
    def resident(a):
        nd = a.ndim
        return pl.BlockSpec(a.shape, lambda i, _nd=nd: (0,) * _nd)

    out = pl.pallas_call(
        _snn_kernel,
        out_shape=jax.ShapeDtypeStruct((b_pad, out_pad), jnp.float32),
        grid=grid,
        in_specs=[
            pl.BlockSpec((tile_b, in_pad), lambda i: (i, 0)),   # x: tiled over batch
            resident(w1p), resident(b1p),
            resident(w2p), resident(b2p),
            resident(w3p), resident(b3p),
        ],
        out_specs=pl.BlockSpec((tile_b, out_pad), lambda i: (i, 0)),
        compiler_params=pltpu.CompilerParams(
            dimension_semantics=("parallel",),
            vmem_limit_bytes=64 << 20,
        ),
    )(xp, w1p, b1p, w2p, b2p, w3p, b3p)

    return out[:B, :out_dim]


def init_params(key, input_shape, output_shape, hidden=HIDDEN):
    # torch.nn.Linear default init: U(-1/sqrt(fan_in), +1/sqrt(fan_in)).
    # Stored as (in_features, out_features) so the kernel does y = x @ W + b.
    def linear(key, fan_in, fan_out):
        kw, kb = jax.random.split(key)
        bound = 1.0 / (fan_in ** 0.5)
        w = jax.random.uniform(kw, (fan_in, fan_out), jnp.float32, -bound, bound)
        b = jax.random.uniform(kb, (1, fan_out), jnp.float32, -bound, bound)
        return w, b

    k1, k2, k3 = jax.random.split(key, 3)
    w1, b1 = linear(k1, input_shape, hidden)
    w2, b2 = linear(k2, hidden, hidden)
    w3, b3 = linear(k3, hidden, output_shape)
    return (w1, b1, w2, b2, w3, b3)


def snn_reference(x, params):
    # Mirrors the kernel's precision policy: bf16 operands, f32 accumulate,
    # bias/ReLU in f32, bf16 between layers.
    w1, b1, w2, b2, w3, b3 = params
    xb = x.astype(jnp.bfloat16)
    w1b, w2b, w3b = (w.astype(jnp.bfloat16) for w in (w1, w2, w3))
    h1 = jnp.maximum(jnp.dot(xb, w1b, preferred_element_type=jnp.float32) + b1, 0.0)
    h1 = h1.astype(jnp.bfloat16)
    h2 = jnp.maximum(jnp.dot(h1, w2b, preferred_element_type=jnp.float32) + b2, 0.0)
    h2 = h2.astype(jnp.bfloat16)
    return jnp.dot(h2, w3b, preferred_element_type=jnp.float32) + b3


if __name__ == "__main__":
    key = jax.random.PRNGKey(0)
    k_x, k_p = jax.random.split(key)

    batch, input_shape, output_shape = 64, 32, 16
    x = jax.random.normal(k_x, (batch, input_shape), jnp.float32)
    params = init_params(k_p, input_shape, output_shape)

    # tile_b=16 -> 4 pipelined grid steps even at this small demo size.
    out = snn_forward(x, params, tile_b=16)
    out = jax.block_until_ready(out)

    ref = snn_reference(x, params)
    assert out.shape == (batch, output_shape)
    assert jnp.allclose(out, ref, atol=1e-3, rtol=1e-3), (
        float(jnp.max(jnp.abs(out - ref))))

    print("KERNEL_OK")
</pallas_src>

<mosaic_0001>
module attributes {stable_mosaic.version = 11 : i64} {
  func.func @_snn_kernel(%arg0: i32, %arg1: memref<16x128xbf16, #tpu.memory_space<vmem>>, %arg2: memref<128x128xbf16, #tpu.memory_space<vmem>>, %arg3: memref<1x128xf32, #tpu.memory_space<vmem>>, %arg4: memref<128x128xbf16, #tpu.memory_space<vmem>>, %arg5: memref<1x128xf32, #tpu.memory_space<vmem>>, %arg6: memref<128x128xbf16, #tpu.memory_space<vmem>>, %arg7: memref<1x128xf32, #tpu.memory_space<vmem>>, %arg8: memref<16x128xf32, #tpu.memory_space<vmem>>) attributes {dimension_semantics = [#tpu.dimension_semantics<parallel>], iteration_bounds = array<i64: 4>, scalar_prefetch = 0 : i64, scratch_operands = 0 : i64, tpu.core_type = #tpu.core_type<tc>, window_params = [{transform_indices = @transform_0, window_bounds = array<i64: 16, 128>}, {pipeline_mode = #tpu.pipeline_mode<synchronous>, transform_indices = @transform_1, window_bounds = array<i64: 128, 128>}, {pipeline_mode = #tpu.pipeline_mode<synchronous>, transform_indices = @transform_2, window_bounds = array<i64: 1, 128>}, {pipeline_mode = #tpu.pipeline_mode<synchronous>, transform_indices = @transform_3, window_bounds = array<i64: 128, 128>}, {pipeline_mode = #tpu.pipeline_mode<synchronous>, transform_indices = @transform_4, window_bounds = array<i64: 1, 128>}, {pipeline_mode = #tpu.pipeline_mode<synchronous>, transform_indices = @transform_5, window_bounds = array<i64: 128, 128>}, {pipeline_mode = #tpu.pipeline_mode<synchronous>, transform_indices = @transform_6, window_bounds = array<i64: 1, 128>}, {transform_indices = @transform_7, window_bounds = array<i64: 16, 128>}]} {
    %c0 = arith.constant 0 : index
    %c0_0 = arith.constant 0 : index
    %0 = vector.load %arg1[%c0, %c0_0] : memref<16x128xbf16, #tpu.memory_space<vmem>>, vector<16x128xbf16>
    %c0_1 = arith.constant 0 : index
    %c0_2 = arith.constant 0 : index
    %1 = vector.load %arg2[%c0_1, %c0_2] : memref<128x128xbf16, #tpu.memory_space<vmem>>, vector<128x128xbf16>
    %cst = arith.constant dense<0.000000e+00> : vector<16x128xf32>
    %2 = tpu.matmul %0, %1, %cst {dimension_numbers = #tpu.dot_dimension_numbers<[1], [0], [0], [1], [0, 0, 1, 1], [], []>} : vector<16x128xbf16>, vector<128x128xbf16>, vector<16x128xf32> -> vector<16x128xf32>
    %c0_3 = arith.constant 0 : index
    %c0_4 = arith.constant 0 : index
    %3 = vector.load %arg3[%c0_3, %c0_4] : memref<1x128xf32, #tpu.memory_space<vmem>>, vector<1x128xf32>
    %4 = vector.broadcast %3 : vector<1x128xf32> to vector<16x128xf32>
    %5 = arith.addf %2, %4 : vector<16x128xf32>
    %cst_5 = arith.constant 0.000000e+00 : f32
    %6 = vector.broadcast %cst_5 : f32 to vector<16x128xf32>
    %7 = arith.maximumf %5, %6 : vector<16x128xf32>
    %8 = arith.truncf %7 : vector<16x128xf32> to vector<16x128xbf16>
    %c0_6 = arith.constant 0 : index
    %c0_7 = arith.constant 0 : index
    %9 = vector.load %arg4[%c0_6, %c0_7] : memref<128x128xbf16, #tpu.memory_space<vmem>>, vector<128x128xbf16>
    %cst_8 = arith.constant dense<0.000000e+00> : vector<16x128xf32>
    %10 = tpu.matmul %8, %9, %cst_8 {dimension_numbers = #tpu.dot_dimension_numbers<[1], [0], [0], [1], [0, 0, 1, 1], [], []>} : vector<16x128xbf16>, vector<128x128xbf16>, vector<16x128xf32> -> vector<16x128xf32>
    %c0_9 = arith.constant 0 : index
    %c0_10 = arith.constant 0 : index
    %11 = vector.load %arg5[%c0_9, %c0_10] : memref<1x128xf32, #tpu.memory_space<vmem>>, vector<1x128xf32>
    %12 = vector.broadcast %11 : vector<1x128xf32> to vector<16x128xf32>
    %13 = arith.addf %10, %12 : vector<16x128xf32>
    %cst_11 = arith.constant 0.000000e+00 : f32
    %14 = vector.broadcast %cst_11 : f32 to vector<16x128xf32>
    %15 = arith.maximumf %13, %14 : vector<16x128xf32>
    %16 = arith.truncf %15 : vector<16x128xf32> to vector<16x128xbf16>
    %c0_12 = arith.constant 0 : index
    %c0_13 = arith.constant 0 : index
    %17 = vector.load %arg6[%c0_12, %c0_13] : memref<128x128xbf16, #tpu.memory_space<vmem>>, vector<128x128xbf16>
    %cst_14 = arith.constant dense<0.000000e+00> : vector<16x128xf32>
    %18 = tpu.matmul %16, %17, %cst_14 {dimension_numbers = #tpu.dot_dimension_numbers<[1], [0], [0], [1], [0, 0, 1, 1], [], []>} : vector<16x128xbf16>, vector<128x128xbf16>, vector<16x128xf32> -> vector<16x128xf32>
    %c0_15 = arith.constant 0 : index
    %c0_16 = arith.constant 0 : index
    %19 = vector.load %arg7[%c0_15, %c0_16] : memref<1x128xf32, #tpu.memory_space<vmem>>, vector<1x128xf32>
    %20 = vector.broadcast %19 : vector<1x128xf32> to vector<16x128xf32>
    %21 = arith.addf %18, %20 : vector<16x128xf32>
    %c0_17 = arith.constant 0 : index
    %c0_18 = arith.constant 0 : index
    %22 = vector.load %arg8[%c0_17, %c0_18] : memref<16x128xf32, #tpu.memory_space<vmem>>, vector<16x128xf32>
    tpu.vector_store %arg8[%c0_17, %c0_18], %21 {strides = array<i32>} : memref<16x128xf32, #tpu.memory_space<vmem>>, vector<16x128xf32>,
    return
  }
  func.func @transform_0(%arg0: i32) -> (i32, i32) {
    %c0_i32 = arith.constant 0 : i32
    %c0_i32_0 = arith.constant 0 : i32
    return %arg0, %c0_i32 : i32, i32
  }
  func.func @transform_1(%arg0: i32) -> (i32, i32) {
    %c0_i32 = arith.constant 0 : i32
    %c0_i32_0 = arith.constant 0 : i32
    %c0_i32_1 = arith.constant 0 : i32
    return %c0_i32, %c0_i32_0 : i32, i32
  }
  func.func @transform_2(%arg0: i32) -> (i32, i32) {
    %c0_i32 = arith.constant 0 : i32
    %c0_i32_0 = arith.constant 0 : i32
    %c0_i32_1 = arith.constant 0 : i32
    return %c0_i32, %c0_i32_0 : i32, i32
  }
  func.func @transform_3(%arg0: i32) -> (i32, i32) {
    %c0_i32 = arith.constant 0 : i32
    %c0_i32_0 = arith.constant 0 : i32
    %c0_i32_1 = arith.constant 0 : i32
    return %c0_i32, %c0_i32_0 : i32, i32
  }
  func.func @transform_4(%arg0: i32) -> (i32, i32) {
    %c0_i32 = arith.constant 0 : i32
    %c0_i32_0 = arith.constant 0 : i32
    %c0_i32_1 = arith.constant 0 : i32
    return %c0_i32, %c0_i32_0 : i32, i32
  }
  func.func @transform_5(%arg0: i32) -> (i32, i32) {
    %c0_i32 = arith.constant 0 : i32
    %c0_i32_0 = arith.constant 0 : i32
    %c0_i32_1 = arith.constant 0 : i32
    return %c0_i32, %c0_i32_0 : i32, i32
  }
  func.func @transform_6(%arg0: i32) -> (i32, i32) {
    %c0_i32 = arith.constant 0 : i32
    %c0_i32_0 = arith.constant 0 : i32
    %c0_i32_1 = arith.constant 0 : i32
    return %c0_i32, %c0_i32_0 : i32, i32
  }
  func.func @transform_7(%arg0: i32) -> (i32, i32) {
    %c0_i32 = arith.constant 0 : i32
    %c0_i32_0 = arith.constant 0 : i32
    return %arg0, %c0_i32 : i32, i32
  }
}

</mosaic_0001>

<llo_original>
// kernel: tpu_custom_call.1
$region0: #{tpu_custom_call.1}
  #allocation0 [shape = 'u32[]', space=smem, size = 0x4, offset = 0x4, fixed_abs, tag = 'smem constant byte address 0x4 - core index']
  #allocation1 [shape = 'u32[72,128]{1,0:T(1,128)}', space=vmem, size = 0x9000, scoped, tag = 'internal scratch']
  %s0 = inlined_call_operand.hbm [shape: bf16[64,128], index: 0, kind: input, shape index: {}]
  %s1 = inlined_call_operand.hbm [shape: bf16[128,128], index: 1, kind: input, shape index: {}]
  %s2 = inlined_call_operand.vmem [shape: f32[1,128], index: 2, kind: input, shape index: {}]
  %s3 = inlined_call_operand.hbm [shape: bf16[128,128], index: 3, kind: input, shape index: {}]
  %s4 = inlined_call_operand.vmem [shape: f32[1,128], index: 4, kind: input, shape index: {}]
  %s5 = inlined_call_operand.hbm [shape: bf16[128,128], index: 5, kind: input, shape index: {}]
  %s6 = inlined_call_operand.vmem [shape: f32[1,128], index: 6, kind: input, shape index: {}]
  %s7 = inlined_call_operand.hbm [shape: f32[64,128], index: 7, kind: output, shape index: {}]
  %s8 = sld [smem:[#allocation0]]
  $region77: #{tpu_custom_call.1} parent=0
    _
  %s10 = ssub.s32 1, %s8
  %s11 = scalar_select 0, %s10, %s8
  $region1: #{tpu_custom_call.1} parent=0
    #allocation2 [shape = 'u8[8192]{0}', space=vmem, size = 0x2000, scoped, tag = 'input window, operand 0']
    #allocation3 [shape = 's32[2]{0}', space=sflag, size = 0x8, scoped, tag = 'scoped memory for tpu_custom_call.1']
    #allocation4 [shape = 's32[2]{0}', space=sflag, size = 0x8, scoped, tag = 'scoped memory for tpu_custom_call.1']
    #allocation5 [shape = 'u8[32768]{0}', space=vmem, size = 0x8000, scoped, tag = 'input window, operand 1, single buffered']
    #allocation6 [shape = 's32[1]{0}', space=sflag, size = 0x4, scoped, tag = 'scoped memory for tpu_custom_call.1']
    #allocation7 [shape = 'u8[32768]{0}', space=vmem, size = 0x8000, scoped, tag = 'input window, operand 3, single buffered']
    #allocation8 [shape = 'u8[32768]{0}', space=vmem, size = 0x8000, scoped, tag = 'input window, operand 5, single buffered']
    #allocation9 [shape = 's32[1]{0}', space=sflag, size = 0x4, scoped, tag = 'scoped memory for tpu_custom_call.1']
    #allocation10 [shape = 'u8[16384]{0}', space=vmem, size = 0x4000, scoped, tag = 'output window, operand 0']
    %12 = vsyncpa [#allocation3], 0
    %s13 = scalar_lea.sflag [#allocation3], 1
    %14 = vsyncpa %s13, 0
    %15 = vsyncpa [#allocation6], 0
    %16 = vsyncpa [#allocation9], 0
    %17 = vsyncpa [#allocation4], 0
    %s18 = scalar_lea.sflag [#allocation4], 1
    %19 = vsyncpa %s18, 0
    loop: start=0, step=1, limit=6
    $region2: #{tpu_custom_call.1} parent=1 // loop_pre_header
      _
    $region3: #{tpu_custom_call.1} parent=1 // loop_header
      %s21 = sphi 0, %s25
      %p22 = scmp.ge.s32.totalorder %s21, 6
      %s31 = sphi 0, %s33
      %s34 = sphi 0, %s31
      %s35 = sphi 0, %s34
      %s51 = sphi 0, %s35
      %s55 = sphi 0, %s55
      %s57 = sphi 0, %s55
      %s58 = sphi 0, %s57
      %s72 = sphi 0, %s58
      %s76 = sphi 0, %s76
      %s78 = sphi 0, %s76
      %s79 = sphi 0, %s78
      %s93 = sphi 0, %s79
      %s97 = sphi 0, %s97
      %s99 = sphi 0, %s97
      %s100 = sphi 0, %s99
      %s114 = sphi 0, %s100
      %s118 = sphi 0, %s118
      %s120 = sphi 0, %s118
      %s121 = sphi 0, %s120
      %s135 = sphi 0, %s121
      %s139 = sphi 0, %s139
      %s141 = sphi 0, %s139
      %s142 = sphi 0, %s141
      %s156 = sphi 0, %s142
      %s160 = sphi 0, %s160
      %s162 = sphi 0, %s160
      %s163 = sphi 0, %s162
      %s177 = sphi 0, %s163
      %s183 = sphi 0, %s185
      %s186 = sphi 0, %s183
      %s187 = sphi 0, %s186
      %s203 = sphi 0, %s187
    $region4: #{tpu_custom_call.1} parent=1 // loop_header_branch
      %24 = sbr.rel (%p22) target = $region8
    $region5: #{tpu_custom_call.1} parent=1 // loop_body
      %s26 = ssub.s32 %s21, 1
      %s27 = ssub.s32 %s21, 2
      %s28 = sadd.s32 %s21, 1
      %s29 = ssub.s32 %s21, %s28
      %p30 = scmp.eq.s32.totalorder %s29, 0
      %s32 = sadd.s32 %s31, 1
      %s33 = scalar_select %p30, %s31, %s32
      %p36 = pneg %p30
      %p37 = scmp.eq.s32.totalorder %s21, 3
      %p38 = por %p36, %p37
      %p39 = scmp.ne.s32.totalorder %s31, %s34
      %p40 = scmp.eq.s32.totalorder %s21, 0
      %p41 = por %p39, %p40
      %p42 = scmp.ne.s32.totalorder %s31, %s34
      %p43 = scmp.eq.s32.totalorder %s26, 3
      %p44 = por %p42, %p43
      %p45 = scmp.ne.s32.totalorder %s34, %s35
      %p46 = scmp.eq.s32.totalorder %s26, 0
      %p47 = por %p45, %p46
      %p48 = scmp.ne.s32.totalorder %s34, %s35
      %p49 = scmp.eq.s32.totalorder %s27, 3
      %p50 = por %p48, %p49
      %p52 = scmp.ne.s32.totalorder %s35, %s51
      %p53 = scmp.eq.s32.totalorder %s27, 0
      %p54 = por %p52, %p53
      %s56 = sadd.s32 %s55, 1
      %p59 = scmp.eq.s32.totalorder %s21, 3
      %p60 = scmp.ne.s32.totalorder %s55, %s57
      %p61 = scmp.eq.s32.totalorder %s21, 0
      %p62 = por %p60, %p61
      %p63 = scmp.ne.s32.totalorder %s55, %s57
      %p64 = scmp.eq.s32.totalorder %s26, 3
      %p65 = por %p63, %p64
      %p66 = scmp.ne.s32.totalorder %s57, %s58
      %p67 = scmp.eq.s32.totalorder %s26, 0
      %p68 = por %p66, %p67
      %p69 = scmp.ne.s32.totalorder %s57, %s58
      %p70 = scmp.eq.s32.totalorder %s27, 3
      %p71 = por %p69, %p70
      %p73 = scmp.ne.s32.totalorder %s58, %s72
      %p74 = scmp.eq.s32.totalorder %s27, 0
      %p75 = por %p73, %p74
      %s77 = sadd.s32 %s76, 1
      %p80 = scmp.eq.s32.totalorder %s21, 3
      %p81 = scmp.ne.s32.totalorder %s76, %s78
      %p82 = scmp.eq.s32.totalorder %s21, 0
      %p83 = por %p81, %p82
      %p84 = scmp.ne.s32.totalorder %s76, %s78
      %p85 = scmp.eq.s32.totalorder %s26, 3
      %p86 = por %p84, %p85
      %p87 = scmp.ne.s32.totalorder %s78, %s79
      %p88 = scmp.eq.s32.totalorder %s26, 0
      %p89 = por %p87, %p88
      %p90 = scmp.ne.s32.totalorder %s78, %s79
      %p91 = scmp.eq.s32.totalorder %s27, 3
      %p92 = por %p90, %p91
      %p94 = scmp.ne.s32.totalorder %s79, %s93
      %p95 = scmp.eq.s32.totalorder %s27, 0
      %p96 = por %p94, %p95
      %s98 = sadd.s32 %s97, 1
      %p101 = scmp.eq.s32.totalorder %s21, 3
      %p102 = scmp.ne.s32.totalorder %s97, %s99
      %p103 = scmp.eq.s32.totalorder %s21, 0
      %p104 = por %p102, %p103
      %p105 = scmp.ne.s32.totalorder %s97, %s99
      %p106 = scmp.eq.s32.totalorder %s26, 3
      %p107 = por %p105, %p106
      %p108 = scmp.ne.s32.totalorder %s99, %s100
      %p109 = scmp.eq.s32.totalorder %s26, 0
      %p110 = por %p108, %p109
      %p111 = scmp.ne.s32.totalorder %s99, %s100
      %p112 = scmp.eq.s32.totalorder %s27, 3
      %p113 = por %p111, %p112
      %p115 = scmp.ne.s32.totalorder %s100, %s114
      %p116 = scmp.eq.s32.totalorder %s27, 0
      %p117 = por %p115, %p116
      %s119 = sadd.s32 %s118, 1
      %p122 = scmp.eq.s32.totalorder %s21, 3
      %p123 = scmp.ne.s32.totalorder %s118, %s120
      %p124 = scmp.eq.s32.totalorder %s21, 0
      %p125 = por %p123, %p124
      %p126 = scmp.ne.s32.totalorder %s118, %s120
      %p127 = scmp.eq.s32.totalorder %s26, 3
      %p128 = por %p126, %p127
      %p129 = scmp.ne.s32.totalorder %s120, %s121
      %p130 = scmp.eq.s32.totalorder %s26, 0
      %p131 = por %p129, %p130
      %p132 = scmp.ne.s32.totalorder %s120, %s121
      %p133 = scmp.eq.s32.totalorder %s27, 3
      %p134 = por %p132, %p133
      %p136 = scmp.ne.s32.totalorder %s121, %s135
      %p137 = scmp.eq.s32.totalorder %s27, 0
      %p138 = por %p136, %p137
      %s140 = sadd.s32 %s139, 1
      %p143 = scmp.eq.s32.totalorder %s21, 3
      %p144 = scmp.ne.s32.totalorder %s139, %s141
      %p145 = scmp.eq.s32.totalorder %s21, 0
      %p146 = por %p144, %p145
      %p147 = scmp.ne.s32.totalorder %s139, %s141
      %p148 = scmp.eq.s32.totalorder %s26, 3
      %p149 = por %p147, %p148
      %p150 = scmp.ne.s32.totalorder %s141, %s142
      %p151 = scmp.eq.s32.totalorder %s26, 0
      %p152 = por %p150, %p151
      %p153 = scmp.ne.s32.totalorder %s141, %s142
      %p154 = scmp.eq.s32.totalorder %s27, 3
      %p155 = por %p153, %p154
      %p157 = scmp.ne.s32.totalorder %s142, %s156
      %p158 = scmp.eq.s32.totalorder %s27, 0
      %p159 = por %p157, %p158
      %s161 = sadd.s32 %s160, 1
      %p164 = scmp.eq.s32.totalorder %s21, 3
      %p165 = scmp.ne.s32.totalorder %s160, %s162
      %p166 = scmp.eq.s32.totalorder %s21, 0
      %p167 = por %p165, %p166
      %p168 = scmp.ne.s32.totalorder %s160, %s162
      %p169 = scmp.eq.s32.totalorder %s26, 3
      %p170 = por %p168, %p169
      %p171 = scmp.ne.s32.totalorder %s162, %s163
      %p172 = scmp.eq.s32.totalorder %s26, 0
      %p173 = por %p171, %p172
      %p174 = scmp.ne.s32.totalorder %s162, %s163
      %p175 = scmp.eq.s32.totalorder %s27, 3
      %p176 = por %p174, %p175
      %p178 = scmp.ne.s32.totalorder %s163, %s177
      %p179 = scmp.eq.s32.totalorder %s27, 0
      %p180 = por %p178, %p179
      %s181 = ssub.s32 %s21, %s28
      %p182 = scmp.eq.s32.totalorder %s181, 0
      %s184 = sadd.s32 %s183, 1
      %s185 = scalar_select %p182, %s183, %s184
      %p188 = pneg %p182
      %p189 = scmp.eq.s32.totalorder %s21, 3
      %p190 = por %p188, %p189
      %p191 = scmp.ne.s32.totalorder %s183, %s186
      %p192 = scmp.eq.s32.totalorder %s21, 0
      %p193 = por %p191, %p192
      %p194 = scmp.ne.s32.totalorder %s183, %s186
      %p195 = scmp.eq.s32.totalorder %s26, 3
      %p196 = por %p194, %p195
      %p197 = scmp.ne.s32.totalorder %s186, %s187
      %p198 = scmp.eq.s32.totalorder %s26, 0
      %p199 = por %p197, %p198
      %p200 = scmp.ne.s32.totalorder %s186, %s187
      %p201 = scmp.eq.s32.totalorder %s27, 3
      %p202 = por %p200, %p201
      %p204 = scmp.ne.s32.totalorder %s187, %s203
      %p205 = scmp.eq.s32.totalorder %s27, 0
      %p206 = por %p204, %p205
      %p207 = scmp.le.s32.totalorder 1, %s21
      %p208 = scmp.lt.s32.totalorder %s21, 5
      %p209 = pnand %p207, %p208
      %p210 = pneg %p209
      // Predicated region
      $region9: #{tpu_custom_call.1} parent=5 // pred_check
        _
      $region10: #{tpu_custom_call.1} parent=5 // pred_check_branch
        %212 = sbr.rel (%p209) target = $region12
      $region11: #{tpu_custom_call.1} parent=5 // pred_region
        %s213 = ssub.s32 %s21, 1
        // Predicated region
        $region13: #{tpu_custom_call.1} parent=11 // pred_check
          %p214 = pneg %p68
        $region14: #{tpu_custom_call.1} parent=11 // pred_check_branch
          %216 = sbr.rel (%p214) target = $region16
        $region15: #{tpu_custom_call.1} parent=11 // pred_region
          %218 = vsyncadd [#allocation6], 0
          %s219 = sshll.u32 %s1, 4
          %s220 = int_to_ptr.hbm [resolvable:$true] %s219
          %s221 = sshll.u32 [#allocation5], 4
          %s222 = int_to_ptr.vmem [resolvable:$true] %s221
          %227 = dma.hbm_to_vmem [thread:$0]  %s220, 1024, %s222, [#allocation6], 64, 64, 4
        $region16: #{tpu_custom_call.1} parent=11 // pred_fallthru
          _
        // Predicated region
        $region17: #{tpu_custom_call.1} parent=11 // pred_check
          %p228 = pneg %p89
        $region18: #{tpu_custom_call.1} parent=11 // pred_check_branch
          %230 = sbr.rel (%p228) target = $region20
        $region19: #{tpu_custom_call.1} parent=11 // pred_region
          _
        $region20: #{tpu_custom_call.1} parent=11 // pred_fallthru
          _
        // Predicated region
        $region21: #{tpu_custom_call.1} parent=11 // pred_check
          %p231 = pneg %p110
        $region22: #{tpu_custom_call.1} parent=11 // pred_check_branch
          %233 = sbr.rel (%p231) target = $region24
        $region23: #{tpu_custom_call.1} parent=11 // pred_region
          %235 = vsyncadd [#allocation6], 0
          %s236 = sshll.u32 %s3, 4
          %s237 = int_to_ptr.hbm [resolvable:$true] %s236
          %s238 = sshll.u32 [#allocation7], 4
          %s239 = int_to_ptr.vmem [resolvable:$true] %s238
          %244 = dma.hbm_to_vmem [thread:$0]  %s237, 1024, %s239, [#allocation6], 64, 64, 4
        $region24: #{tpu_custom_call.1} parent=11 // pred_fallthru
          _
        // Predicated region
        $region25: #{tpu_custom_call.1} parent=11 // pred_check
          %p245 = pneg %p131
        $region26: #{tpu_custom_call.1} parent=11 // pred_check_branch
          %247 = sbr.rel (%p245) target = $region28
        $region27: #{tpu_custom_call.1} parent=11 // pred_region
          _
        $region28: #{tpu_custom_call.1} parent=11 // pred_fallthru
          _
        // Predicated region
        $region29: #{tpu_custom_call.1} parent=11 // pred_check
          %p248 = pneg %p152
        $region30: #{tpu_custom_call.1} parent=11 // pred_check_branch
          %250 = sbr.rel (%p248) target = $region32
        $region31: #{tpu_custom_call.1} parent=11 // pred_region
          %252 = vsyncadd [#allocation9], 0
          %s253 = sshll.u32 %s5, 4
          %s254 = int_to_ptr.hbm [resolvable:$true] %s253
          %s255 = sshll.u32 [#allocation8], 4
          %s256 = int_to_ptr.vmem [resolvable:$true] %s255
          %261 = dma.hbm_to_vmem [thread:$0]  %s254, 1024, %s256, [#allocation9], 64, 64, 4
        $region32: #{tpu_custom_call.1} parent=11 // pred_fallthru
          _
        // Predicated region
        $region33: #{tpu_custom_call.1} parent=11 // pred_check
          %p262 = pneg %p173
        $region34: #{tpu_custom_call.1} parent=11 // pred_check_branch
          %264 = sbr.rel (%p262) target = $region36
        $region35: #{tpu_custom_call.1} parent=11 // pred_region
          _
        $region36: #{tpu_custom_call.1} parent=11 // pred_fallthru
          _
      $region12: #{tpu_custom_call.1} parent=5 // pred_fallthru
        _
      %p265 = scmp.lt.s32.totalorder %s21, 4
      // Predicated region
      $region37: #{tpu_custom_call.1} parent=5 // pred_check
        %p266 = pneg %p265
      $region38: #{tpu_custom_call.1} parent=5 // pred_check_branch
        %268 = sbr.rel (%p266) target = $region40
      $region39: #{tpu_custom_call.1} parent=5 // pred_region
        // Predicated region
        $region41: #{tpu_custom_call.1} parent=39 // pred_check
          %p269 = pneg %p41
        $region42: #{tpu_custom_call.1} parent=39 // pred_check_branch
          %271 = sbr.rel (%p269) target = $region44
        $region43: #{tpu_custom_call.1} parent=39 // pred_region
          %s272 = sand.u32 %s31, 1
          %s273 = scalar_lea.sflag [#allocation3], %s272
          %s274 = sand.u32 %s31, 1
          %s275 = smul.addr %s274, 8
          %s276 = scalar_lea.vmem [#allocation2], %s275
          %s277 = smul.u32 2, %s21
          %279 = vsyncadd %s273, 0
          %s280 = smul.addr %s277, 4
          %s281 = scalar_lea.hbm %s0, %s280
          %s282 = sshll.u32 %s281, 4
          %s283 = int_to_ptr.hbm [resolvable:$true] %s282
          %s284 = sshll.u32 %s276, 4
          %s285 = int_to_ptr.vmem [resolvable:$true] %s284
          %290 = dma.hbm_to_vmem [thread:$0]  %s283, 128, %s285, %s273, 64, 64, 4
        $region44: #{tpu_custom_call.1} parent=39 // pred_fallthru
          _
      $region40: #{tpu_custom_call.1} parent=5 // pred_fallthru
        _
      %p291 = scmp.le.s32.totalorder 1, %s21
      %p292 = scmp.lt.s32.totalorder %s21, 5
      %p293 = pnand %p291, %p292
      %p294 = pneg %p293
      // Predicated region
      $region45: #{tpu_custom_call.1} parent=5 // pred_check
        _
      $region46: #{tpu_custom_call.1} parent=5 // pred_check_branch
        %296 = sbr.rel (%p293) target = $region48
      $region47: #{tpu_custom_call.1} parent=5 // pred_region
        %s297 = ssub.s32 %s21, 1
        %s298 = sand.u32 %s34, 1
        %s299 = scalar_lea.sflag [#allocation3], %s298
        %s300 = sand.u32 %s34, 1
        %s301 = smul.addr %s300, 8
        %s302 = scalar_lea.vmem [#allocation2], %s301
        // Predicated region
        $region49: #{tpu_custom_call.1} parent=47 // pred_check
          %p303 = pneg %p47
        $region50: #{tpu_custom_call.1} parent=47 // pred_check_branch
          %305 = sbr.rel (%p303) target = $region52
        $region51: #{tpu_custom_call.1} parent=47 // pred_region
          %307 = dma.done %s299, 128
        $region52: #{tpu_custom_call.1} parent=47 // pred_fallthru
          _
        // Predicated region
        $region53: #{tpu_custom_call.1} parent=47 // pred_check
          %p308 = pneg %p68
        $region54: #{tpu_custom_call.1} parent=47 // pred_check_branch
          %310 = sbr.rel (%p308) target = $region56
        $region55: #{tpu_custom_call.1} parent=47 // pred_region
          %312 = dma.done [#allocation6], 1024
        $region56: #{tpu_custom_call.1} parent=47 // pred_fallthru
          _
        // Predicated region
        $region57: #{tpu_custom_call.1} parent=47 // pred_check
          %p313 = pneg %p110
        $region58: #{tpu_custom_call.1} parent=47 // pred_check_branch
          %315 = sbr.rel (%p313) target = $region60
        $region59: #{tpu_custom_call.1} parent=47 // pred_region
          %317 = dma.done [#allocation6], 1024
        $region60: #{tpu_custom_call.1} parent=47 // pred_fallthru
          _
        // Predicated region
        $region61: #{tpu_custom_call.1} parent=47 // pred_check
          %p318 = pneg %p152
        $region62: #{tpu_custom_call.1} parent=47 // pred_check_branch
          %320 = sbr.rel (%p318) target = $region64
        $region63: #{tpu_custom_call.1} parent=47 // pred_region
          %322 = dma.done [#allocation9], 1024
        $region64: #{tpu_custom_call.1} parent=47 // pred_fallthru
          _
        %s323 = sand.u32 %s34, 1
        %s324 = scalar_lea.sflag [#allocation3], %s323
        %s325 = sand.u32 %s34, 1
        %s326 = smul.addr %s325, 8
        %s327 = scalar_lea.vmem [#allocation2], %s326
        %p328 = pneg %p47
        %p329 = pneg %p44
        %p330 = pneg %p68
        %p331 = pneg %p65
        %p332 = pneg %p89
        %p333 = pneg %p86
        %p334 = pneg %p110
        %p335 = pneg %p107
        %p336 = pneg %p131
        %p337 = pneg %p128
        %p338 = pneg %p152
        %p339 = pneg %p149
        %p340 = pneg %p173
        %p341 = pneg %p170
        %p342 = pneg %p199
        %p343 = pneg %p196
        %s344 = sand.u32 %s186, 1
        %s345 = scalar_lea.sflag [#allocation4], %s344
        %s346 = sand.u32 %s186, 1
        %s347 = smul.addr %s346, 16
        %s348 = scalar_lea.vmem [#allocation10], %s347
        %s349 = smul.u32 2, %s26
        %s350 = smul.u32 2, %s26
        %v351 = vld [vmem:[%s302] sm:$0xf]
        %v352 = vld [vmem:[%s302 + $0x4] sm:$0xf]
        %v353 = vld [vmem:[#allocation5] sm:$0xf]
        %v354 = vld [vmem:[#allocation5 + $0x4] sm:$0xf]
        %v355 = vld [vmem:[#allocation5 + $0x8] sm:$0xf]
        %v356 = vld [vmem:[#allocation5 + $0xc] sm:$0xf]
        %v357 = vld [vmem:[#allocation5 + $0x10] sm:$0xf]
        %v358 = vld [vmem:[#allocation5 + $0x14] sm:$0xf]
        %v359 = vld [vmem:[#allocation5 + $0x18] sm:$0xf]
        %v360 = vld [vmem:[#allocation5 + $0x1c] sm:$0xf]
        %v361 = vld [vmem:[#allocation5 + $0x20] sm:$0xf]
        %v362 = vld [vmem:[#allocation5 + $0x24] sm:$0xf]
        %v363 = vld [vmem:[#allocation5 + $0x28] sm:$0xf]
        %v364 = vld [vmem:[#allocation5 + $0x2c] sm:$0xf]
        %v365 = vld [vmem:[#allocation5 + $0x30] sm:$0xf]
        %v366 = vld [vmem:[#allocation5 + $0x34] sm:$0xf]
        %v367 = vld [vmem:[#allocation5 + $0x38] sm:$0xf]
        %v368 = vld [vmem:[#allocation5 + $0x3c] sm:$0xf]
        %v369 = vld [vmem:[%s2] sm:$0x1]
        %v371 = vperm.slane %v369, 0
        %v375 = vunpack.c.l.b16 %v351
        %v376 = vunpack.c.l.b16 %v352
        %v377 = vpack.c.b16 %v376, %v375
        %v395 = vunpack.c.l.b16 %v353
        %v396 = vunpack.c.l.b16 %v354
        %v397 = vunpack.c.l.b16 %v355
        %v398 = vunpack.c.l.b16 %v356
        %v399 = vunpack.c.l.b16 %v357
        %v400 = vunpack.c.l.b16 %v358
        %v401 = vunpack.c.l.b16 %v359
        %v402 = vunpack.c.l.b16 %v360
        %v403 = vunpack.c.l.b16 %v361
        %v404 = vunpack.c.l.b16 %v362
        %v405 = vunpack.c.l.b16 %v363
        %v406 = vunpack.c.l.b16 %v364
        %v407 = vunpack.c.l.b16 %v365
        %v408 = vunpack.c.l.b16 %v366
        %v409 = vunpack.c.l.b16 %v367
        %v410 = vunpack.c.l.b16 %v368
        %v411 = vpack.c.b16 %v396, %v395
        %v412 = vpack.c.b16 %v398, %v397
        %v413 = vpack.c.b16 %v400, %v399
        %v414 = vpack.c.b16 %v402, %v401
        %v415 = vpack.c.b16 %v404, %v403
        %v416 = vpack.c.b16 %v406, %v405
        %v417 = vpack.c.b16 %v408, %v407
        %v418 = vpack.c.b16 %v410, %v409
        %427 = vmatpush.bf16.msra.mxu0 %v418
        %428 = vmatpush.bf16.msra.mxu0 %v417
        %429 = vmatpush.bf16.msra.mxu0 %v416
        %430 = vmatpush.bf16.msra.mxu0 %v415
        %431 = vmatpush.bf16.msra.mxu0 %v414
        %432 = vmatpush.bf16.msra.mxu0 %v413
        %433 = vmatpush.bf16.msra.mxu0 %v412
        %434 = vmatpush.bf16.msra.mxu0 %v411
        %435 = vmatmul.bf16.gmra.mxu0 %v377
        %v436 = vpop.f32.mrf.mxu0
        %v437 = vadd.f32 %v371, %v436
        %v438 = vpop.f32.mrf.mxu0
        %v439 = vadd.f32 %v371, %v438
        %440 = vdwg.mxu0
        %v441 = vmax.f32 %v437, 0.0
        %v442 = vmax.f32 %v439, 0.0
        %v443 = vpack.c.bf16 %v442, %v441
        %v444 = vld [vmem:[#allocation7] sm:$0xf]
        %v445 = vld [vmem:[#allocation7 + $0x4] sm:$0xf]
        %v446 = vld [vmem:[#allocation7 + $0x8] sm:$0xf]
        %v447 = vld [vmem:[#allocation7 + $0xc] sm:$0xf]
        %v448 = vld [vmem:[#allocation7 + $0x10] sm:$0xf]
        %v449 = vld [vmem:[#allocation7 + $0x14] sm:$0xf]
        %v450 = vld [vmem:[#allocation7 + $0x18] sm:$0xf]
        %v451 = vld [vmem:[#allocation7 + $0x1c] sm:$0xf]
        %v452 = vld [vmem:[#allocation7 + $0x20] sm:$0xf]
        %v453 = vld [vmem:[#allocation7 + $0x24] sm:$0xf]
        %v454 = vld [vmem:[#allocation7 + $0x28] sm:$0xf]
        %v455 = vld [vmem:[#allocation7 + $0x2c] sm:$0xf]
        %v456 = vld [vmem:[#allocation7 + $0x30] sm:$0xf]
        %v457 = vld [vmem:[#allocation7 + $0x34] sm:$0xf]
        %v458 = vld [vmem:[#allocation7 + $0x38] sm:$0xf]
        %v459 = vld [vmem:[#allocation7 + $0x3c] sm:$0xf]
        %v460 = vld [vmem:[%s4] sm:$0x1]
        %v462 = vperm.slane %v460, 0
        %v480 = vunpack.c.l.b16 %v444
        %v481 = vunpack.c.l.b16 %v445
        %v482 = vunpack.c.l.b16 %v446
        %v483 = vunpack.c.l.b16 %v447
        %v484 = vunpack.c.l.b16 %v448
        %v485 = vunpack.c.l.b16 %v449
        %v486 = vunpack.c.l.b16 %v450
        %v487 = vunpack.c.l.b16 %v451
        %v488 = vunpack.c.l.b16 %v452
        %v489 = vunpack.c.l.b16 %v453
        %v490 = vunpack.c.l.b16 %v454
        %v491 = vunpack.c.l.b16 %v455
        %v492 = vunpack.c.l.b16 %v456
        %v493 = vunpack.c.l.b16 %v457
        %v494 = vunpack.c.l.b16 %v458
        %v495 = vunpack.c.l.b16 %v459
        %v496 = vpack.c.b16 %v481, %v480
        %v497 = vpack.c.b16 %v483, %v482
        %v498 = vpack.c.b16 %v485, %v484
        %v499 = vpack.c.b16 %v487, %v486
        %v500 = vpack.c.b16 %v489, %v488
        %v501 = vpack.c.b16 %v491, %v490
        %v502 = vpack.c.b16 %v493, %v492
        %v503 = vpack.c.b16 %v495, %v494
        %512 = vmatpush.bf16.msra.mxu0 %v503
        %513 = vmatpush.bf16.msra.mxu0 %v502
        %514 = vmatpush.bf16.msra.mxu0 %v501
        %515 = vmatpush.bf16.msra.mxu0 %v500
        %516 = vmatpush.bf16.msra.mxu0 %v499
        %517 = vmatpush.bf16.msra.mxu0 %v498
        %518 = vmatpush.bf16.msra.mxu0 %v497
        %519 = vmatpush.bf16.msra.mxu0 %v496
        %520 = vmatmul.bf16.gmra.mxu0 %v443
        %v521 = vpop.f32.mrf.mxu0
        %v522 = vadd.f32 %v462, %v521
        %v523 = vpop.f32.mrf.mxu0
        %v524 = vadd.f32 %v462, %v523
        %525 = vdwg.mxu0
        %v526 = vmax.f32 %v522, 0.0
        %v527 = vmax.f32 %v524, 0.0
        %v528 = vpack.c.bf16 %v527, %v526
        %v529 = vld [vmem:[#allocation8] sm:$0xf]
        %v530 = vld [vmem:[#allocation8 + $0x4] sm:$0xf]
        %v531 = vld [vmem:[#allocation8 + $0x8] sm:$0xf]
        %v532 = vld [vmem:[#allocation8 + $0xc] sm:$0xf]
        %v533 = vld [vmem:[#allocation8 + $0x10] sm:$0xf]
        %v534 = vld [vmem:[#allocation8 + $0x14] sm:$0xf]
        %v535 = vld [vmem:[#allocation8 + $0x18] sm:$0xf]
        %v536 = vld [vmem:[#allocation8 + $0x1c] sm:$0xf]
        %v537 = vld [vmem:[#allocation8 + $0x20] sm:$0xf]
        %v538 = vld [vmem:[#allocation8 + $0x24] sm:$0xf]
        %v539 = vld [vmem:[#allocation8 + $0x28] sm:$0xf]
        %v540 = vld [vmem:[#allocation8 + $0x2c] sm:$0xf]
        %v541 = vld [vmem:[#allocation8 + $0x30] sm:$0xf]
        %v542 = vld [vmem:[#allocation8 + $0x34] sm:$0xf]
        %v543 = vld [vmem:[#allocation8 + $0x38] sm:$0xf]
        %v544 = vld [vmem:[#allocation8 + $0x3c] sm:$0xf]
        %v545 = vld [vmem:[%s6] sm:$0x1]
        %v547 = vperm.slane %v545, 0
        %v565 = vunpack.c.l.b16 %v529
        %v566 = vunpack.c.l.b16 %v530
        %v567 = vunpack.c.l.b16 %v531
        %v568 = vunpack.c.l.b16 %v532
        %v569 = vunpack.c.l.b16 %v533
        %v570 = vunpack.c.l.b16 %v534
        %v571 = vunpack.c.l.b16 %v535
        %v572 = vunpack.c.l.b16 %v536
        %v573 = vunpack.c.l.b16 %v537
        %v574 = vunpack.c.l.b16 %v538
        %v575 = vunpack.c.l.b16 %v539
        %v576 = vunpack.c.l.b16 %v540
        %v577 = vunpack.c.l.b16 %v541
        %v578 = vunpack.c.l.b16 %v542
        %v579 = vunpack.c.l.b16 %v543
        %v580 = vunpack.c.l.b16 %v544
        %v581 = vpack.c.b16 %v566, %v565
        %v582 = vpack.c.b16 %v568, %v567
        %v583 = vpack.c.b16 %v570, %v569
        %v584 = vpack.c.b16 %v572, %v571
        %v585 = vpack.c.b16 %v574, %v573
        %v586 = vpack.c.b16 %v576, %v575
        %v587 = vpack.c.b16 %v578, %v577
        %v588 = vpack.c.b16 %v580, %v579
        %597 = vmatpush.bf16.msra.mxu0 %v588
        %598 = vmatpush.bf16.msra.mxu0 %v587
        %599 = vmatpush.bf16.msra.mxu0 %v586
        %600 = vmatpush.bf16.msra.mxu0 %v585
        %601 = vmatpush.bf16.msra.mxu0 %v584
        %602 = vmatpush.bf16.msra.mxu0 %v583
        %603 = vmatpush.bf16.msra.mxu0 %v582
        %604 = vmatpush.bf16.msra.mxu0 %v581
        %605 = vmatmul.bf16.gmra.mxu0 %v528
        %v606 = vpop.f32.mrf.mxu0
        %v607 = vadd.f32 %v547, %v606
        %v608 = vpop.f32.mrf.mxu0
        %v609 = vadd.f32 %v547, %v608
        %610 = vdwg.mxu0
        %611 = vst [vmem:[%s348] sm:$0xff] %v607
        %612 = vst [vmem:[%s348 + $0x8] sm:$0xff] %v609
        %s613 = sand.u32 %s186, 1
        %s614 = scalar_lea.sflag [#allocation4], %s613
        %s615 = sand.u32 %s186, 1
        %s616 = smul.addr %s615, 16
        %s617 = scalar_lea.vmem [#allocation10], %s616
        // Predicated region
        $region65: #{tpu_custom_call.1} parent=47 // pred_check
          %p618 = pneg %p196
        $region66: #{tpu_custom_call.1} parent=47 // pred_check_branch
          %620 = sbr.rel (%p618) target = $region68
        $region67: #{tpu_custom_call.1} parent=47 // pred_region
          %s621 = smul.u32 2, %s26
          %623 = vsyncadd %s614, 0
          %s624 = smul.addr %s621, 8
          %s625 = scalar_lea.hbm %s7, %s624
          %s626 = sshll.u32 %s617, 4
          %s627 = int_to_ptr.vmem [resolvable:$true] %s626
          %s628 = sshll.u32 %s625, 4
          %s629 = int_to_ptr.hbm [resolvable:$true] %s628
          %634 = dma.vmem_to_hbm [thread:$0]  %s627, 256, %s629, %s614, 128, 128, 8
        $region68: #{tpu_custom_call.1} parent=47 // pred_fallthru
          _
      $region48: #{tpu_custom_call.1} parent=5 // pred_fallthru
        _
      %p635 = scmp.le.s32.totalorder 2, %s21
      // Predicated region
      $region69: #{tpu_custom_call.1} parent=5 // pred_check
        %p636 = pneg %p635
      $region70: #{tpu_custom_call.1} parent=5 // pred_check_branch
        %638 = sbr.rel (%p636) target = $region72
      $region71: #{tpu_custom_call.1} parent=5 // pred_region
        %s639 = ssub.s32 %s21, 2
        // Predicated region
        $region73: #{tpu_custom_call.1} parent=71 // pred_check
          %p640 = pneg %p202
        $region74: #{tpu_custom_call.1} parent=71 // pred_check_branch
          %642 = sbr.rel (%p640) target = $region76
        $region75: #{tpu_custom_call.1} parent=71 // pred_region
          %s643 = sand.u32 %s187, 1
          %s644 = scalar_lea.sflag [#allocation4], %s643
          %s645 = sand.u32 %s187, 1
          %s646 = smul.addr %s645, 16
          %s647 = scalar_lea.vmem [#allocation10], %s646
          %649 = dma.done %s644, 256
        $region76: #{tpu_custom_call.1} parent=71 // pred_fallthru
          _
      $region72: #{tpu_custom_call.1} parent=5 // pred_fallthru
        _
    $region6: #{tpu_custom_call.1} parent=1 // loop_footer
      %s25 = sadd.s32 1, %s21
    $region7: #{tpu_custom_call.1} parent=1 // loop_footer_branch
      %20 = sbr.rel target = $region3
    $region8: #{tpu_custom_call.1} parent=1 // loop_exit
      _
    %650 = vsyncpa [#allocation3], 1
    %s651 = scalar_lea.sflag [#allocation3], 1
    %652 = vsyncpa %s651, 1
    %653 = vsyncpa [#allocation6], 1
    %654 = vsyncpa [#allocation9], 1
    %655 = vsyncpa [#allocation4], 1
    %s656 = scalar_lea.sflag [#allocation4], 1
    %657 = vsyncpa %s656, 1

</llo_original>
